<compile_context>
chip_gen: v6e
topology: v6e:2x2x1
jax: 0.10.0
libtpu: 0.0.40
codegen_flags: <defaults>
</compile_context>

<pallas_src>
import jax
import jax.numpy as jnp
from jax.experimental import pallas as pl
from jax.experimental.pallas import tpu as pltpu


def _patch_embed_kernel(x_ref, w_ref, b_ref, o_ref):
    # x_ref: (TM, K)  f32 patches (cast to bf16 here -> no HBM pre-pass)
    # w_ref: (K, N)   bf16 projection weight (VMEM-resident, constant index_map)
    # b_ref: (1, N)   f32 bias
    # o_ref: (TM, N)  output tile
    x = x_ref[...].astype(jnp.bfloat16)
    y = jnp.dot(x, w_ref[...], preferred_element_type=jnp.float32)
    o_ref[...] = (y + b_ref[...]).astype(o_ref.dtype)


def patch_embed(x, weight, bias, *, patch_size, flatten=True):
    """Equivalent of PatchEmbed.forward (norm = Identity).

    x:      (B, C, L)
    weight: (N, C, patch_size)  -- PyTorch Conv1d weight layout
    bias:   (N,)
    returns (B, P, N) if flatten else (B, N, P), with P = L // patch_size.
    """
    B, C, L = x.shape
    N = weight.shape[0]
    P = L // patch_size
    K = C * patch_size
    M = B * P
    out_dtype = x.dtype

    # --- patch extraction (metadata-only for the in_chans == 1 default) -----
    if C == 1:
        xp = x[:, 0, : P * patch_size].reshape(M, K)
    else:
        # TODO(synk): fold the channel transpose into an in-kernel reduction
        # (trailing "arbitrary" C grid axis + f32 VMEM accumulator) instead of
        # this extra HBM transpose pass for multi-channel inputs.
        xp = (x[:, :, : P * patch_size]
              .reshape(B, C, P, patch_size)
              .transpose(0, 2, 1, 3)
              .reshape(M, K))

    w = weight.reshape(N, K).T.astype(jnp.bfloat16)        # (K, N), tiny
    b = bias.reshape(1, N).astype(jnp.float32)

    # --- M tile selection ----------------------------------------------------
    # Double-buffered x tile (f32) + out tile (f32) must fit a conservative
    # VMEM budget valid on v7x (64 MiB physical) as well as v5e/v6e (128 MiB).
    vmem_budget = 12 * 1024 * 1024
    bytes_per_row = 2 * 4 * (K + N)            # 2 buffers x f32 (in-row + out-row)
    tm_vmem = max(8, (vmem_budget // max(bytes_per_row, 1)) // 8 * 8)

    if M < 8:
        TM = M                                  # block equal to full M dim
    else:
        TM = min(1024, tm_vmem, (M // 8) * 8)
        # v7x megacore: make sure the "parallel" M axis has >=2 tiles so both
        # TensorCores get work when there is enough of it.
        if -(-M // TM) == 1 and M >= 16:
            TM = max(8, ((M // 2) // 8) * 8)

    num_m = -(-M // TM)                         # cdiv; partial last block masked

    w_bytes = K * N * 2
    # TODO(synk): if K*N ever grows beyond a few MiB (not the PatchEmbed
    # regime), add K/N tiling with a reduction grid axis instead of keeping
    # the whole weight resident.
    cost = pl.CostEstimate(
        flops=2 * M * K * N,
        transcendentals=0,
        bytes_accessed=(M * K * xp.dtype.itemsize          # activations: one read
                        + w_bytes + N * 4                   # weight + bias: once
                        + M * N * jnp.dtype(out_dtype).itemsize),
    )

    vmem_limit = int(min(48 * 1024 * 1024,
                         max(32 * 1024 * 1024,
                             2 * (2 * TM * 4 * (K + N) + w_bytes + N * 4))))

    out = pl.pallas_call(
        _patch_embed_kernel,
        out_shape=jax.ShapeDtypeStruct((M, N), out_dtype),
        grid=(num_m,),
        in_specs=[
            pl.BlockSpec((TM, K), lambda i: (i, 0)),        # streamed activations
            pl.BlockSpec((K, N), lambda i: (0, 0)),         # VMEM-resident weight
            pl.BlockSpec((1, N), lambda i: (0, 0)),         # VMEM-resident bias
        ],
        out_specs=pl.BlockSpec((TM, N), lambda i: (i, 0)),
        compiler_params=pltpu.CompilerParams(
            dimension_semantics=("parallel",),
            vmem_limit_bytes=vmem_limit,
        ),
        cost_estimate=cost,
    )(xp, w, b)

    out = out.reshape(B, P, N)                              # metadata-only
    if not flatten:
        # TODO(synk): if flatten=False is hot, emit (B, N, P) directly from the
        # kernel via out_specs instead of this extra transpose pass.
        out = out.transpose(0, 2, 1)
    return out
    # norm_layer is None in the module defaults -> Identity; a non-trivial
    # norm_layer would be a fused epilogue in the kernel.


if __name__ == "__main__":
    # Small shapes consistent with the module's semantics (in_chans=1 default).
    B, C = 2, 1
    patch_size = 60
    num_features = 60
    L = 480                      # -> P = 8 patches, M = 16

    key = jax.random.PRNGKey(0)
    kx, kw, kb = jax.random.split(key, 3)
    x = jax.random.normal(kx, (B, C, L), dtype=jnp.float32)
    # Deterministic synthetic Conv1d parameters (PyTorch layout (N, C, ks)).
    fan_in = C * patch_size
    bound = 1.0 / (fan_in ** 0.5)
    weight = jax.random.uniform(kw, (num_features, C, patch_size),
                                minval=-bound, maxval=bound, dtype=jnp.float32)
    bias = jax.random.uniform(kb, (num_features,),
                              minval=-bound, maxval=bound, dtype=jnp.float32)

    out = patch_embed(x, weight, bias, patch_size=patch_size, flatten=True)
    out = jax.block_until_ready(out)

    # Pure-JAX f32 reference of the same conv-as-patch-matmul semantics.
    P = L // patch_size
    xp_ref = (x.reshape(B, C, P, patch_size)
                .transpose(0, 2, 1, 3)
                .reshape(B, P, C * patch_size))
    ref = jnp.einsum("bpk,nk->bpn", xp_ref,
                     weight.reshape(num_features, -1)) + bias
    assert out.shape == (B, P, num_features)
    # bf16 inputs with f32 accumulation -> loosened tolerance vs f32 reference.
    assert jnp.allclose(out, ref, atol=2e-2, rtol=2e-2), \
        float(jnp.max(jnp.abs(out - ref)))

    print("KERNEL_OK")
</pallas_src>

<mosaic_0001>
module attributes {stable_mosaic.version = 11 : i64} {
  func.func @_patch_embed_kernel(%arg0: i32, %arg1: memref<8x60xf32, #tpu.memory_space<vmem>>, %arg2: memref<60x60xbf16, #tpu.memory_space<vmem>>, %arg3: memref<1x60xf32, #tpu.memory_space<vmem>>, %arg4: memref<8x60xf32, #tpu.memory_space<vmem>>) attributes {dimension_semantics = [#tpu.dimension_semantics<parallel>], iteration_bounds = array<i64: 2>, scalar_prefetch = 0 : i64, scratch_operands = 0 : i64, tpu.core_type = #tpu.core_type<tc>, window_params = [{transform_indices = @transform_0, window_bounds = array<i64: 8, 60>}, {pipeline_mode = #tpu.pipeline_mode<synchronous>, transform_indices = @transform_1, window_bounds = array<i64: 60, 60>}, {pipeline_mode = #tpu.pipeline_mode<synchronous>, transform_indices = @transform_2, window_bounds = array<i64: 1, 60>}, {transform_indices = @transform_3, window_bounds = array<i64: 8, 60>}]} {
    %c0 = arith.constant 0 : index
    %c0_0 = arith.constant 0 : index
    %0 = vector.load %arg1[%c0, %c0_0] : memref<8x60xf32, #tpu.memory_space<vmem>>, vector<8x60xf32>
    %1 = arith.truncf %0 : vector<8x60xf32> to vector<8x60xbf16>
    %c0_1 = arith.constant 0 : index
    %c0_2 = arith.constant 0 : index
    %2 = vector.load %arg2[%c0_1, %c0_2] : memref<60x60xbf16, #tpu.memory_space<vmem>>, vector<60x60xbf16>
    %cst = arith.constant dense<0.000000e+00> : vector<8x60xf32>
    %3 = tpu.matmul %1, %2, %cst {dimension_numbers = #tpu.dot_dimension_numbers<[1], [0], [0], [1], [0, 0, 1, 1], [], []>} : vector<8x60xbf16>, vector<60x60xbf16>, vector<8x60xf32> -> vector<8x60xf32>
    %c0_3 = arith.constant 0 : index
    %c0_4 = arith.constant 0 : index
    %4 = vector.load %arg3[%c0_3, %c0_4] : memref<1x60xf32, #tpu.memory_space<vmem>>, vector<1x60xf32>
    %5 = vector.broadcast %4 : vector<1x60xf32> to vector<8x60xf32>
    %6 = arith.addf %3, %5 : vector<8x60xf32>
    %c0_5 = arith.constant 0 : index
    %c0_6 = arith.constant 0 : index
    %7 = vector.load %arg4[%c0_5, %c0_6] : memref<8x60xf32, #tpu.memory_space<vmem>>, vector<8x60xf32>
    tpu.vector_store %arg4[%c0_5, %c0_6], %6 {strides = array<i32>} : memref<8x60xf32, #tpu.memory_space<vmem>>, vector<8x60xf32>,
    return
  }
  func.func @transform_0(%arg0: i32) -> (i32, i32) {
    %c0_i32 = arith.constant 0 : i32
    %c0_i32_0 = arith.constant 0 : i32
    return %arg0, %c0_i32 : i32, i32
  }
  func.func @transform_1(%arg0: i32) -> (i32, i32) {
    %c0_i32 = arith.constant 0 : i32
    %c0_i32_0 = arith.constant 0 : i32
    %c0_i32_1 = arith.constant 0 : i32
    return %c0_i32, %c0_i32_0 : i32, i32
  }
  func.func @transform_2(%arg0: i32) -> (i32, i32) {
    %c0_i32 = arith.constant 0 : i32
    %c0_i32_0 = arith.constant 0 : i32
    %c0_i32_1 = arith.constant 0 : i32
    return %c0_i32, %c0_i32_0 : i32, i32
  }
  func.func @transform_3(%arg0: i32) -> (i32, i32) {
    %c0_i32 = arith.constant 0 : i32
    %c0_i32_0 = arith.constant 0 : i32
    return %arg0, %c0_i32 : i32, i32
  }
}

</mosaic_0001>

<llo_original>
// kernel: tpu_custom_call.1
$region0: #{tpu_custom_call.1}
  #allocation0 [shape = 'u32[]', space=smem, size = 0x4, offset = 0x4, fixed_abs, tag = 'smem constant byte address 0x4 - core index']
  #allocation1 [shape = 'u32[144,128]{1,0:T(1,128)}', space=vmem, size = 0x12000, scoped, tag = 'internal scratch']
  %s0 = inlined_call_operand.hbm [shape: f32[16,60], index: 0, kind: input, shape index: {}]
  %s1 = inlined_call_operand.hbm [shape: bf16[60,60], index: 1, kind: input, shape index: {}]
  %s2 = inlined_call_operand.vmem [shape: f32[1,60], index: 2, kind: input, shape index: {}]
  %s3 = inlined_call_operand.hbm [shape: f32[16,60], index: 3, kind: output, shape index: {}]
  %s4 = sld [smem:[#allocation0]]
  $region53: #{tpu_custom_call.1} parent=0
    _
  %s6 = ssub.s32 1, %s4
  %s7 = scalar_select 0, %s6, %s4
  $region1: #{tpu_custom_call.1} parent=0
    #allocation2 [shape = 'u8[8192]{0}', space=vmem, size = 0x2000, scoped, tag = 'input window, operand 0']
    #allocation3 [shape = 's32[2]{0}', space=sflag, size = 0x8, scoped, tag = 'scoped memory for tpu_custom_call.1']
    #allocation4 [shape = 's32[2]{0}', space=sflag, size = 0x8, scoped, tag = 'scoped memory for tpu_custom_call.1']
    #allocation5 [shape = 'u8[16384]{0}', space=vmem, size = 0x4000, scoped, tag = 'input window, operand 1, single buffered']
    #allocation6 [shape = 's32[1]{0}', space=sflag, size = 0x4, scoped, tag = 'scoped memory for tpu_custom_call.1']
    #allocation7 [shape = 'u8[8192]{0}', space=vmem, size = 0x2000, scoped, tag = 'output window, operand 0']
    %8 = vsyncpa [#allocation3], 0
    %s9 = scalar_lea.sflag [#allocation3], 1
    %10 = vsyncpa %s9, 0
    %11 = vsyncpa [#allocation6], 0
    %12 = vsyncpa [#allocation4], 0
    %s13 = scalar_lea.sflag [#allocation4], 1
    %14 = vsyncpa %s13, 0
    loop: start=0, step=1, limit=4
    $region2: #{tpu_custom_call.1} parent=1 // loop_pre_header
      _
    $region3: #{tpu_custom_call.1} parent=1 // loop_header
      %s16 = sphi 0, %s20
      %p17 = scmp.ge.s32.totalorder %s16, 4
      %s26 = sphi 0, %s28
      %s29 = sphi 0, %s26
      %s30 = sphi 0, %s29
      %s46 = sphi 0, %s30
      %s50 = sphi 0, %s50
      %s52 = sphi 0, %s50
      %s53 = sphi 0, %s52
      %s67 = sphi 0, %s53
      %s71 = sphi 0, %s71
      %s73 = sphi 0, %s71
      %s74 = sphi 0, %s73
      %s88 = sphi 0, %s74
      %s94 = sphi 0, %s96
      %s97 = sphi 0, %s94
      %s98 = sphi 0, %s97
      %s114 = sphi 0, %s98
    $region4: #{tpu_custom_call.1} parent=1 // loop_header_branch
      %19 = sbr.rel (%p17) target = $region8
    $region5: #{tpu_custom_call.1} parent=1 // loop_body
      %s21 = ssub.s32 %s16, 1
      %s22 = ssub.s32 %s16, 2
      %s23 = sadd.s32 %s16, 1
      %s24 = ssub.s32 %s16, %s23
      %p25 = scmp.eq.s32.totalorder %s24, 0
      %s27 = sadd.s32 %s26, 1
      %s28 = scalar_select %p25, %s26, %s27
      %p31 = pneg %p25
      %p32 = scmp.eq.s32.totalorder %s16, 1
      %p33 = por %p31, %p32
      %p34 = scmp.ne.s32.totalorder %s26, %s29
      %p35 = scmp.eq.s32.totalorder %s16, 0
      %p36 = por %p34, %p35
      %p37 = scmp.ne.s32.totalorder %s26, %s29
      %p38 = scmp.eq.s32.totalorder %s21, 1
      %p39 = por %p37, %p38
      %p40 = scmp.ne.s32.totalorder %s29, %s30
      %p41 = scmp.eq.s32.totalorder %s21, 0
      %p42 = por %p40, %p41
      %p43 = scmp.ne.s32.totalorder %s29, %s30
      %p44 = scmp.eq.s32.totalorder %s22, 1
      %p45 = por %p43, %p44
      %p47 = scmp.ne.s32.totalorder %s30, %s46
      %p48 = scmp.eq.s32.totalorder %s22, 0
      %p49 = por %p47, %p48
      %s51 = sadd.s32 %s50, 1
      %p54 = scmp.eq.s32.totalorder %s16, 1
      %p55 = scmp.ne.s32.totalorder %s50, %s52
      %p56 = scmp.eq.s32.totalorder %s16, 0
      %p57 = por %p55, %p56
      %p58 = scmp.ne.s32.totalorder %s50, %s52
      %p59 = scmp.eq.s32.totalorder %s21, 1
      %p60 = por %p58, %p59
      %p61 = scmp.ne.s32.totalorder %s52, %s53
      %p62 = scmp.eq.s32.totalorder %s21, 0
      %p63 = por %p61, %p62
      %p64 = scmp.ne.s32.totalorder %s52, %s53
      %p65 = scmp.eq.s32.totalorder %s22, 1
      %p66 = por %p64, %p65
      %p68 = scmp.ne.s32.totalorder %s53, %s67
      %p69 = scmp.eq.s32.totalorder %s22, 0
      %p70 = por %p68, %p69
      %s72 = sadd.s32 %s71, 1
      %p75 = scmp.eq.s32.totalorder %s16, 1
      %p76 = scmp.ne.s32.totalorder %s71, %s73
      %p77 = scmp.eq.s32.totalorder %s16, 0
      %p78 = por %p76, %p77
      %p79 = scmp.ne.s32.totalorder %s71, %s73
      %p80 = scmp.eq.s32.totalorder %s21, 1
      %p81 = por %p79, %p80
      %p82 = scmp.ne.s32.totalorder %s73, %s74
      %p83 = scmp.eq.s32.totalorder %s21, 0
      %p84 = por %p82, %p83
      %p85 = scmp.ne.s32.totalorder %s73, %s74
      %p86 = scmp.eq.s32.totalorder %s22, 1
      %p87 = por %p85, %p86
      %p89 = scmp.ne.s32.totalorder %s74, %s88
      %p90 = scmp.eq.s32.totalorder %s22, 0
      %p91 = por %p89, %p90
      %s92 = ssub.s32 %s16, %s23
      %p93 = scmp.eq.s32.totalorder %s92, 0
      %s95 = sadd.s32 %s94, 1
      %s96 = scalar_select %p93, %s94, %s95
      %p99 = pneg %p93
      %p100 = scmp.eq.s32.totalorder %s16, 1
      %p101 = por %p99, %p100
      %p102 = scmp.ne.s32.totalorder %s94, %s97
      %p103 = scmp.eq.s32.totalorder %s16, 0
      %p104 = por %p102, %p103
      %p105 = scmp.ne.s32.totalorder %s94, %s97
      %p106 = scmp.eq.s32.totalorder %s21, 1
      %p107 = por %p105, %p106
      %p108 = scmp.ne.s32.totalorder %s97, %s98
      %p109 = scmp.eq.s32.totalorder %s21, 0
      %p110 = por %p108, %p109
      %p111 = scmp.ne.s32.totalorder %s97, %s98
      %p112 = scmp.eq.s32.totalorder %s22, 1
      %p113 = por %p111, %p112
      %p115 = scmp.ne.s32.totalorder %s98, %s114
      %p116 = scmp.eq.s32.totalorder %s22, 0
      %p117 = por %p115, %p116
      %p118 = scmp.le.s32.totalorder 1, %s16
      %p119 = scmp.lt.s32.totalorder %s16, 3
      %p120 = pnand %p118, %p119
      %p121 = pneg %p120
      // Predicated region
      $region9: #{tpu_custom_call.1} parent=5 // pred_check
        _
      $region10: #{tpu_custom_call.1} parent=5 // pred_check_branch
        %123 = sbr.rel (%p120) target = $region12
      $region11: #{tpu_custom_call.1} parent=5 // pred_region
        %s124 = ssub.s32 %s16, 1
        // Predicated region
        $region13: #{tpu_custom_call.1} parent=11 // pred_check
          %p125 = pneg %p63
        $region14: #{tpu_custom_call.1} parent=11 // pred_check_branch
          %127 = sbr.rel (%p125) target = $region16
        $region15: #{tpu_custom_call.1} parent=11 // pred_region
          %s129 = ssub.s32 512, 512
          %130 = vsyncadd [#allocation6], %s129
          %s131 = sshll.u32 [#allocation5], 4
          %s132 = int_to_ptr.vmem [resolvable:$true] %s131
          %137 = dma.hbm_to_vmem [thread:$0]  %s1, 512, %s132, [#allocation6], 64, 64, 4
        $region16: #{tpu_custom_call.1} parent=11 // pred_fallthru
          _
        // Predicated region
        $region17: #{tpu_custom_call.1} parent=11 // pred_check
          %p138 = pneg %p84
        $region18: #{tpu_custom_call.1} parent=11 // pred_check_branch
          %140 = sbr.rel (%p138) target = $region20
        $region19: #{tpu_custom_call.1} parent=11 // pred_region
          _
        $region20: #{tpu_custom_call.1} parent=11 // pred_fallthru
          _
      $region12: #{tpu_custom_call.1} parent=5 // pred_fallthru
        _
      %p141 = scmp.lt.s32.totalorder %s16, 2
      // Predicated region
      $region21: #{tpu_custom_call.1} parent=5 // pred_check
        %p142 = pneg %p141
      $region22: #{tpu_custom_call.1} parent=5 // pred_check_branch
        %144 = sbr.rel (%p142) target = $region24
      $region23: #{tpu_custom_call.1} parent=5 // pred_region
        // Predicated region
        $region25: #{tpu_custom_call.1} parent=23 // pred_check
          %p145 = pneg %p36
        $region26: #{tpu_custom_call.1} parent=23 // pred_check_branch
          %147 = sbr.rel (%p145) target = $region28
        $region27: #{tpu_custom_call.1} parent=23 // pred_region
          %s148 = sand.u32 %s26, 1
          %s149 = scalar_lea.sflag [#allocation3], %s148
          %s150 = sand.u32 %s26, 1
          %s151 = smul.addr %s150, 8
          %s152 = scalar_lea.vmem [#allocation2], %s151
          %s154 = ssub.s32 128, 128
          %155 = vsyncadd %s149, %s154
          %s156 = smul.addr %s16, 128
          %s157 = scalar_lea.hbm %s0, %s156
          %s159 = sshll.u32 %s152, 4
          %s160 = int_to_ptr.vmem [resolvable:$true] %s159
          %162 = dma.hbm_to_vmem [thread:$0]  %s157, 128, %s160, %s149
        $region28: #{tpu_custom_call.1} parent=23 // pred_fallthru
          _
      $region24: #{tpu_custom_call.1} parent=5 // pred_fallthru
        _
      %p163 = scmp.le.s32.totalorder 1, %s16
      %p164 = scmp.lt.s32.totalorder %s16, 3
      %p165 = pnand %p163, %p164
      %p166 = pneg %p165
      // Predicated region
      $region29: #{tpu_custom_call.1} parent=5 // pred_check
        _
      $region30: #{tpu_custom_call.1} parent=5 // pred_check_branch
        %168 = sbr.rel (%p165) target = $region32
      $region31: #{tpu_custom_call.1} parent=5 // pred_region
        %s169 = ssub.s32 %s16, 1
        %s170 = sand.u32 %s29, 1
        %s171 = scalar_lea.sflag [#allocation3], %s170
        %s172 = sand.u32 %s29, 1
        %s173 = smul.addr %s172, 8
        %s174 = scalar_lea.vmem [#allocation2], %s173
        // Predicated region
        $region33: #{tpu_custom_call.1} parent=31 // pred_check
          %p175 = pneg %p42
        $region34: #{tpu_custom_call.1} parent=31 // pred_check_branch
          %177 = sbr.rel (%p175) target = $region36
        $region35: #{tpu_custom_call.1} parent=31 // pred_region
          %178 = dma.done %s171, 128
        $region36: #{tpu_custom_call.1} parent=31 // pred_fallthru
          _
        // Predicated region
        $region37: #{tpu_custom_call.1} parent=31 // pred_check
          %p179 = pneg %p63
        $region38: #{tpu_custom_call.1} parent=31 // pred_check_branch
          %181 = sbr.rel (%p179) target = $region40
        $region39: #{tpu_custom_call.1} parent=31 // pred_region
          %182 = dma.done [#allocation6], 512
        $region40: #{tpu_custom_call.1} parent=31 // pred_fallthru
          _
        %s183 = sand.u32 %s29, 1
        %s184 = scalar_lea.sflag [#allocation3], %s183
        %s185 = sand.u32 %s29, 1
        %s186 = smul.addr %s185, 8
        %s187 = scalar_lea.vmem [#allocation2], %s186
        %p188 = pneg %p42
        %p189 = pneg %p39
        %p190 = pneg %p63
        %p191 = pneg %p60
        %p192 = pneg %p84
        %p193 = pneg %p81
        %p194 = pneg %p110
        %p195 = pneg %p107
        %s196 = sand.u32 %s97, 1
        %s197 = scalar_lea.sflag [#allocation4], %s196
        %s198 = sand.u32 %s97, 1
        %s199 = smul.addr %s198, 8
        %s200 = scalar_lea.vmem [#allocation7], %s199
        %v202 = vld [vmem:[%s174] sm:$0xff]
        %v203 = vpack.c.bf16 %v202, %v202
        %v204 = vld [vmem:[#allocation5] sm:$0xf]
        %v205 = vld [vmem:[#allocation5 + $0x4] sm:$0xf]
        %v206 = vld [vmem:[#allocation5 + $0x8] sm:$0xf]
        %v207 = vld [vmem:[#allocation5 + $0xc] sm:$0xf]
        %v208 = vld [vmem:[#allocation5 + $0x10] sm:$0xf]
        %v209 = vld [vmem:[#allocation5 + $0x14] sm:$0xf]
        %v210 = vld [vmem:[#allocation5 + $0x18] sm:$0xf]
        %v211 = vld [vmem:[#allocation5 + $0x1c] sm:$0x3]
        %v212 = vld [vmem:[%s2] sm:$0x1]
        %v214 = vlaneseq
        %v215 = vshrl.u32 %v214, 7
        %v216 = vsub.s32 0, %v215
        %v217 = vrot.slane %v212, %v216
        %v227 = vunpack.c.l.b16 %v204
        %v228 = vunpack.c.l.b16 %v205
        %v229 = vunpack.c.l.b16 %v206
        %v230 = vunpack.c.l.b16 %v207
        %v231 = vunpack.c.l.b16 %v208
        %v232 = vunpack.c.l.b16 %v209
        %v233 = vunpack.c.l.b16 %v210
        %v234 = vunpack.c.l.b16 %v211
        %v235 = vpack.c.b16 %v228, %v227
        %v236 = vpack.c.b16 %v230, %v229
        %v237 = vpack.c.b16 %v232, %v231
        %v238 = vpack.c.b16 %v234, %v233
        %vm242 = vcmask 490496
        %v244 = vsel %vm242, %v203, 0
        %vm246 = vcmask 1045504
        %v248 = vsel %vm246, %v238, 0
        %250 = vmatprep.subr.bf16.mxu0 0
        %251 = vmatpush1.bf16.msra.mxu0 0
        %252 = vmatprep.subr.bf16.mxu0 0
        %253 = vmatpush1.bf16.msra.mxu0 0
        %254 = vmatprep.subr.bf16.mxu0 0
        %255 = vmatpush1.bf16.msra.mxu0 0
        %256 = vmatprep.subr.bf16.mxu0 0
        %257 = vmatpush1.bf16.msra.mxu0 0
        %258 = vmatprep.subr.bf16.mxu0 0
        %259 = vmatpush1.bf16.msra.mxu0 %v248
        %260 = vmatprep.subr.bf16.mxu0 0
        %261 = vmatpush1.bf16.msra.mxu0 %v237
        %262 = vmatprep.subr.bf16.mxu0 0
        %263 = vmatpush1.bf16.msra.mxu0 %v236
        %264 = vmatprep.subr.bf16.mxu0 0
        %265 = vmatpush1.bf16.msra.mxu0 %v235
        %266 = vmatprep.subr.bf16.mxu0 0
        %267 = vmatpush2.bf16.msra.mxu0 0
        %268 = vmatprep.subr.bf16.mxu0 0
        %269 = vmatpush2.bf16.msra.mxu0 0
        %270 = vmatprep.subr.bf16.mxu0 0
        %271 = vmatpush2.bf16.msra.mxu0 0
        %272 = vmatprep.subr.bf16.mxu0 0
        %273 = vmatpush2.bf16.msra.mxu0 0
        %274 = vmatprep.subr.bf16.mxu0 0
        %275 = vmatpush2.bf16.msra.mxu0 0
        %276 = vmatprep.subr.bf16.mxu0 0
        %277 = vmatpush2.bf16.msra.mxu0 0
        %278 = vmatprep.subr.bf16.mxu0 0
        %279 = vmatpush2.bf16.msra.mxu0 0
        %280 = vmatprep.subr.bf16.mxu0 0
        %281 = vmatpush2.bf16.msra.mxu0 0
        %282 = vmatprep.mubr.bf16.mxu0 0
        %283 = vmatmul.mubr.bf16.gmra.mxu0 %v244
        %v284 = vpop.f32.mrf.mxu0
        %v285 = vadd.f32 %v217, %v284
        %v286 = vpop.f32.mrf.mxu0
        %v287 = vpop.f32.mrf.mxu0
        %v288 = vpop.f32.mrf.mxu0
        %289 = vdwg.mxu0
        %290 = vst.msk [vmem:[%s200] sm:$0xff] %vm242, %v285
        %s291 = sand.u32 %s97, 1
        %s292 = scalar_lea.sflag [#allocation4], %s291
        %s293 = sand.u32 %s97, 1
        %s294 = smul.addr %s293, 8
        %s295 = scalar_lea.vmem [#allocation7], %s294
        // Predicated region
        $region41: #{tpu_custom_call.1} parent=31 // pred_check
          %p296 = pneg %p107
        $region42: #{tpu_custom_call.1} parent=31 // pred_check_branch
          %298 = sbr.rel (%p296) target = $region44
        $region43: #{tpu_custom_call.1} parent=31 // pred_region
          %s300 = ssub.s32 128, 128
          %301 = vsyncadd %s292, %s300
          %s302 = smul.addr %s21, 128
          %s303 = scalar_lea.hbm %s3, %s302
          %s305 = sshll.u32 %s295, 4
          %s306 = int_to_ptr.vmem [resolvable:$true] %s305
          %308 = dma.vmem_to_hbm [thread:$0]  %s306, 128, %s303, %s292
        $region44: #{tpu_custom_call.1} parent=31 // pred_fallthru
          _
      $region32: #{tpu_custom_call.1} parent=5 // pred_fallthru
        _
      %p309 = scmp.le.s32.totalorder 2, %s16
      // Predicated region
      $region45: #{tpu_custom_call.1} parent=5 // pred_check
        %p310 = pneg %p309
      $region46: #{tpu_custom_call.1} parent=5 // pred_check_branch
        %312 = sbr.rel (%p310) target = $region48
      $region47: #{tpu_custom_call.1} parent=5 // pred_region
        %s313 = ssub.s32 %s16, 2
        // Predicated region
        $region49: #{tpu_custom_call.1} parent=47 // pred_check
          %p314 = pneg %p113
        $region50: #{tpu_custom_call.1} parent=47 // pred_check_branch
          %316 = sbr.rel (%p314) target = $region52
        $region51: #{tpu_custom_call.1} parent=47 // pred_region
          %s317 = sand.u32 %s98, 1
          %s318 = scalar_lea.sflag [#allocation4], %s317
          %s319 = sand.u32 %s98, 1
          %s320 = smul.addr %s319, 8
          %s321 = scalar_lea.vmem [#allocation7], %s320
          %322 = dma.done %s318, 128
        $region52: #{tpu_custom_call.1} parent=47 // pred_fallthru
          _
      $region48: #{tpu_custom_call.1} parent=5 // pred_fallthru
        _
    $region6: #{tpu_custom_call.1} parent=1 // loop_footer
      %s20 = sadd.s32 1, %s16
    $region7: #{tpu_custom_call.1} parent=1 // loop_footer_branch
      %15 = sbr.rel target = $region3
    $region8: #{tpu_custom_call.1} parent=1 // loop_exit
      _
    %323 = vsyncpa [#allocation3], 1
    %s324 = scalar_lea.sflag [#allocation3], 1
    %325 = vsyncpa %s324, 1
    %326 = vsyncpa [#allocation6], 1
    %327 = vsyncpa [#allocation4], 1
    %s328 = scalar_lea.sflag [#allocation4], 1
    %329 = vsyncpa %s328, 1

</llo_original>
